<compile_context>
chip_gen: v7x
topology: tpu7x:2x2x1
jax: 0.10.0
libtpu: 0.0.40
codegen_flags: <defaults>
</compile_context>

<pallas_src>
import jax
import jax.numpy as jnp
from jax.experimental import pallas as pl
from jax.experimental.pallas import tpu as pltpu

THETA1 = 0.5
THETA2 = -0.5


def _sublane_multiple(dtype) -> int:
    """Sublane packing multiple for a dtype: 8 (f32), 16 (bf16/f16), 32 (int8)."""
    itemsize = jnp.dtype(dtype).itemsize
    return max(8, 32 // itemsize)


def _make_kernel(theta1: float, theta2: float):
    t1 = float(theta1)
    t2 = float(theta2)

    def kernel(x_ref, o_ref):
        # Native-dtype tile in, f32 math in vregs, native-dtype store.
        x = x_ref[...].astype(jnp.float32)
        # -t1*x^2 + t2*x  ==  x * (t2 - t1*x)   (Horner form)
        o_ref[...] = (x * (t2 - t1 * x)).astype(o_ref.dtype)

    return kernel


def toy_model_modified(x, theta1=THETA1, theta2=THETA2, *, donate=False):
    """Elementwise -theta1*x^2 + theta2*x on a tensor of any shape/dtype."""
    orig_shape = x.shape
    dtype = x.dtype
    n_elem = x.size
    itemsize = jnp.dtype(dtype).itemsize
    sub = _sublane_multiple(dtype)

    # --- Lane-dense slab layout -------------------------------------------
    # Prefer the widest lane count that also makes rows a sublane multiple.
    lanes = None
    for cand in (1024, 512, 256, 128):
        if n_elem % cand == 0 and (n_elem // cand) % sub == 0:
            lanes = cand
            break
    if lanes is None:
        for cand in (1024, 512, 256, 128):
            if n_elem % cand == 0:
                lanes = cand
                break

    padded = False
    if lanes is None:
        # Element count not a multiple of 128: pad flat vector to a full tile.
        lanes = 128
        padded = True
        rows = pl.cdiv(n_elem, lanes)
        rows = ((rows + sub - 1) // sub) * sub
        total = rows * lanes
        x2d = jnp.pad(x.reshape(-1), (0, total - n_elem)).reshape(rows, lanes)
    else:
        rows = n_elem // lanes
        x2d = x.reshape(rows, lanes)

    # --- Block sizing (mem-bound elementwise: biggest legal block wins) ----
    target_bytes = 4 << 20                                  # ~4 MiB / operand
    target_rows = max(sub, (target_bytes // (lanes * itemsize)) // sub * sub)

    if rows <= target_rows or rows % sub != 0:
        block_rows = rows                                    # full extent: always legal
        steps = 1
    else:
        block_rows = target_rows
        steps = pl.cdiv(rows, block_rows)
        if steps > 1 and steps % 2 == 1:
            # Even grid count -> balanced sharding over v7x's 2 TensorCores.
            steps += 1
            block_rows = ((pl.cdiv(rows, steps) + sub - 1) // sub) * sub
            steps = pl.cdiv(rows, block_rows)

    block_bytes = block_rows * lanes * itemsize
    # in + out, double-buffered, plus headroom; clamp under v7x scoped VMEM.
    vmem_limit = int(min(30 << 20, max(16 << 20, 6 * block_bytes)))

    kernel = _make_kernel(theta1, theta2)
    io_aliases = {0: 0} if (donate and not padded) else {}

    out2d = pl.pallas_call(
        kernel,
        out_shape=jax.ShapeDtypeStruct((rows, lanes), dtype),
        grid_spec=pl.GridSpec(
            grid=(steps,),
            in_specs=[pl.BlockSpec((block_rows, lanes), lambda i: (i, 0))],
            out_specs=pl.BlockSpec((block_rows, lanes), lambda i: (i, 0)),
        ),
        compiler_params=pltpu.CompilerParams(
            dimension_semantics=("parallel",),
            vmem_limit_bytes=vmem_limit,
        ),
        input_output_aliases=io_aliases,
    )(x2d)

    if padded:
        return out2d.reshape(-1)[:n_elem].reshape(orig_shape)
    return out2d.reshape(orig_shape)


if __name__ == "__main__":
    # Deterministic parameters, matching nn.Parameter(torch.tensor(0.5)) / (-0.5).
    theta1 = 0.5
    theta2 = -0.5

    # Deterministic small NCHW input.
    key = jax.random.PRNGKey(0)
    x = jax.random.normal(key, (2, 4, 16, 16), dtype=jnp.float32)

    y = toy_model_modified(x, theta1, theta2)
    jax.block_until_ready(y)

    # Sanity check against plain-JAX reference.
    y_ref = -theta1 * x**2 + theta2 * x
    assert y.shape == x.shape and y.dtype == x.dtype
    assert jnp.allclose(y, y_ref, atol=1e-6, rtol=1e-6)

    print("KERNEL_OK")
</pallas_src>

<mosaic_0001>
module attributes {stable_mosaic.version = 11 : i64} {
  func.func @kernel(%arg0: i32, %arg1: memref<8x256xf32, #tpu.memory_space<vmem>>, %arg2: memref<8x256xf32, #tpu.memory_space<vmem>>) attributes {dimension_semantics = [#tpu.dimension_semantics<parallel>], iteration_bounds = array<i64: 1>, scalar_prefetch = 0 : i64, scratch_operands = 0 : i64, tpu.core_type = #tpu.core_type<tc>, window_params = [{transform_indices = @transform_0, window_bounds = array<i64: 8, 256>}, {transform_indices = @transform_1, window_bounds = array<i64: 8, 256>}]} {
    %c0 = arith.constant 0 : index
    %c0_0 = arith.constant 0 : index
    %0 = vector.load %arg1[%c0, %c0_0] : memref<8x256xf32, #tpu.memory_space<vmem>>, vector<8x256xf32>
    %cst = arith.constant 5.000000e-01 : f32
    %1 = vector.broadcast %cst : f32 to vector<8x256xf32>
    %2 = arith.mulf %1, %0 : vector<8x256xf32>
    %cst_1 = arith.constant -5.000000e-01 : f32
    %3 = vector.broadcast %cst_1 : f32 to vector<8x256xf32>
    %4 = arith.subf %3, %2 : vector<8x256xf32>
    %5 = arith.mulf %0, %4 : vector<8x256xf32>
    %c0_2 = arith.constant 0 : index
    %c0_3 = arith.constant 0 : index
    %6 = vector.load %arg2[%c0_2, %c0_3] : memref<8x256xf32, #tpu.memory_space<vmem>>, vector<8x256xf32>
    tpu.vector_store %arg2[%c0_2, %c0_3], %5 {strides = array<i32>} : memref<8x256xf32, #tpu.memory_space<vmem>>, vector<8x256xf32>,
    return
  }
  func.func @transform_0(%arg0: i32) -> (i32, i32) {
    %c0_i32 = arith.constant 0 : i32
    %c0_i32_0 = arith.constant 0 : i32
    return %arg0, %c0_i32 : i32, i32
  }
  func.func @transform_1(%arg0: i32) -> (i32, i32) {
    %c0_i32 = arith.constant 0 : i32
    %c0_i32_0 = arith.constant 0 : i32
    return %arg0, %c0_i32 : i32, i32
  }
}

</mosaic_0001>

<llo_original>
// kernel: tpu_custom_call.1
$region0: #{tpu_custom_call.1}
  #allocation0 [shape = 'u32[]', space=smem, size = 0x4, offset = 0x4, fixed_abs, tag = 'smem constant byte address 0x4 - core index']
  #allocation1 [shape = 'u32[144,128]{1,0:T(1,128)}', space=vmem, size = 0x12000, scoped, tag = 'internal scratch']
  %s0 = inlined_call_operand.hbm [shape: f32[8,256], index: 0, kind: input, shape index: {}]
  %s1 = inlined_call_operand.hbm [shape: f32[8,256], index: 1, kind: output, shape index: {}]
  %s2 = sld [smem:[#allocation0]]
  $region18: #{tpu_custom_call.1} parent=0
    _
  %s4 = ssub.s32 1, %s2
  %s5 = scalar_select 0, %s4, %s2
  $region1: #{tpu_custom_call.1} parent=0
    #allocation2 [shape = 'u8[8192]{0}', space=vmem, size = 0x2000, scoped, tag = 'input window, operand 0, single buffered']
    #allocation3 [shape = 's32[1]{0}', space=sflag, size = 0x4, scoped, tag = 'scoped memory for tpu_custom_call.1']
    #allocation4 [shape = 's32[1]{0}', space=sflag, size = 0x4, scoped, tag = 'scoped memory for tpu_custom_call.1']
    #allocation5 [shape = 'u8[8192]{0}', space=vmem, size = 0x2000, scoped, tag = 'output window, operand 0, single buffered']
    %6 = vsyncpa [#allocation3], 0
    %7 = vsyncpa [#allocation4], 0
    // Predicated region
    $region2: #{tpu_custom_call.1} parent=1 // pred_check
      _
    $region3: #{tpu_custom_call.1} parent=1 // pred_check_branch
      %9 = sbr.rel (0) target = $region5
    $region4: #{tpu_custom_call.1} parent=1 // pred_region
      %s11 = ssub.s32 256, 256
      %12 = vsyncadd [#allocation3], %s11
      %s14 = sshll.u32 [#allocation2], 4
      %s15 = int_to_ptr.vmem [resolvable:$true] %s14
      %17 = dma.hbm_to_vmem [thread:$0]  %s0, 256, %s15, [#allocation3]
    $region5: #{tpu_custom_call.1} parent=1 // pred_fallthru
      _
    // Predicated region
    $region6: #{tpu_custom_call.1} parent=1 // pred_check
      _
    $region7: #{tpu_custom_call.1} parent=1 // pred_check_branch
      %19 = sbr.rel (0) target = $region9
    $region8: #{tpu_custom_call.1} parent=1 // pred_region
      %20 = dma.done [#allocation3], 256
    $region9: #{tpu_custom_call.1} parent=1 // pred_fallthru
      _
    %v21 = vld [vmem:[#allocation2] sm:$0xff]
    %v22 = vld [vmem:[#allocation2 + $0x8] sm:$0xff]
    %v23 = vmul.f32 %v21, 0.5
    %v24 = vmul.f32 %v22, 0.5
    %v25 = vsub.f32 -0.5, %v23
    %v26 = vsub.f32 -0.5, %v24
    %v27 = vmul.f32 %v21, %v25
    %v28 = vmul.f32 %v22, %v26
    %29 = vst [vmem:[#allocation5] sm:$0xff] %v27
    %30 = vst [vmem:[#allocation5 + $0x8] sm:$0xff] %v28
    // Predicated region
    $region10: #{tpu_custom_call.1} parent=1 // pred_check
      _
    $region11: #{tpu_custom_call.1} parent=1 // pred_check_branch
      %32 = sbr.rel (0) target = $region13
    $region12: #{tpu_custom_call.1} parent=1 // pred_region
      %s34 = ssub.s32 256, 256
      %35 = vsyncadd [#allocation4], %s34
      %s37 = sshll.u32 [#allocation5], 4
      %s38 = int_to_ptr.vmem [resolvable:$true] %s37
      %40 = dma.vmem_to_hbm [thread:$0]  %s38, 256, %s1, [#allocation4]
    $region13: #{tpu_custom_call.1} parent=1 // pred_fallthru
      _
    // Predicated region
    $region14: #{tpu_custom_call.1} parent=1 // pred_check
      _
    $region15: #{tpu_custom_call.1} parent=1 // pred_check_branch
      %42 = sbr.rel (0) target = $region17
    $region16: #{tpu_custom_call.1} parent=1 // pred_region
      %43 = dma.done [#allocation4], 256
    $region17: #{tpu_custom_call.1} parent=1 // pred_fallthru
      _
    %44 = vsyncpa [#allocation3], 1
    %45 = vsyncpa [#allocation4], 1

</llo_original>
